<compile_context>
chip_gen: v7x
topology: tpu7x:2x2x1
jax: 0.10.0
libtpu: 0.0.40
codegen_flags: <defaults>
</compile_context>

<pallas_src>
import numpy as np
import jax
import jax.numpy as jnp
from jax.experimental import pallas as pl
from jax.experimental.pallas import tpu as pltpu


LEAKY_SLOPE = 0.2
H1, H1P, H2, H3 = 64, 128, 128, 256        # fc1 width, fc1 padded width, fc2, fc3
TILE_B_MAX = 2048                           # upper bound on batch rows per grid step
VMEM_BUDGET = 40 * 1024 * 1024              # working-set target used for tile sizing
VMEM_LIMIT_CAP = 48 * 1024 * 1024           # stays under v7x's 64 MiB physical VMEM


def _leaky_relu(x, slope=LEAKY_SLOPE):
    return jnp.where(x > 0, x, slope * x)


def _round_up(x, m):
    return (x + m - 1) // m * m


def _cdiv(a, b):
    return -(-a // b)


def _vmem_footprint(tile_b, img_dim, n_classes):
    """Rough VMEM bytes: double-buffered streams + resident weights + temporaries."""
    f32, bf16 = 4, 2
    stream = 2 * tile_b * (img_dim + n_classes + 1) * f32
    weights = 2 * ((n_classes + img_dim) * H1P * bf16
                   + H1P * H2 * bf16 + H2 * H3 * bf16
                   + (H1P + H2 + 2 * H3 + 1) * f32)
    temps = tile_b * (img_dim + n_classes) * bf16 + 2 * tile_b * (H1P + H2 + H3) * f32
    return stream + weights + temps


def _pick_batch_tile(B, img_dim, n_classes):
    """Largest tile fitting the VMEM budget; >=2 tiles when B allows (v7x megacore);
    sized to minimize dead rows in the ragged last tile."""
    f32, bf16 = 4, 2
    per_row = (2 * (img_dim + n_classes + 1) * f32
               + (img_dim + n_classes) * bf16
               + 2 * (H1P + H2 + H3) * f32)
    fixed = 2 * ((n_classes + img_dim) * H1P * bf16
                 + H1P * H2 * bf16 + H2 * H3 * bf16
                 + (H1P + H2 + 2 * H3 + 1) * f32)
    cap = max(8, (VMEM_BUDGET - fixed) // per_row)
    cap = max(8, min(TILE_B_MAX, cap) // 8 * 8)
    n_tiles = _cdiv(B, cap)
    if n_tiles == 1 and B >= 16:
        n_tiles = 2                              # keep both v7x TensorCores busy
    tile_b = _round_up(_cdiv(B, n_tiles), 8)
    return tile_b, _cdiv(B, tile_b)


def _discriminator_kernel(label_ref, x_ref,
                          w1l_ref, w1i_ref, b1_ref,
                          w2_ref, b2_ref,
                          w3_ref, b3_ref,
                          w4_ref, b4_ref,
                          out_ref):
    """Fused 4-layer MLP for one batch tile: (Linear+LeakyReLU)x3 + Linear."""
    # Cast the f32 activation streams to bf16 in-register (native MXU path);
    # all accumulation / bias adds / LeakyReLU stay in f32.
    x_bf = x_ref[...].astype(jnp.bfloat16)
    lab_bf = label_ref[...].astype(jnp.bfloat16)

    # fc1: split matmul (image part + label part), f32 accumulation on the MXU.
    h = (jnp.dot(x_bf, w1i_ref[...], preferred_element_type=jnp.float32)
         + jnp.dot(lab_bf, w1l_ref[...], preferred_element_type=jnp.float32)
         + b1_ref[...])
    h = _leaky_relu(h)                                    # (tile_b, 128): 64 real + 64 zero-pad

    # fc2 (+Dropout eval) + LeakyReLU
    h = jnp.dot(h.astype(jnp.bfloat16), w2_ref[...],
                preferred_element_type=jnp.float32) + b2_ref[...]
    h = _leaky_relu(h)                                    # (tile_b, 128)

    # fc3 (+Dropout eval) + LeakyReLU
    h = jnp.dot(h.astype(jnp.bfloat16), w3_ref[...],
                preferred_element_type=jnp.float32) + b3_ref[...]
    h = _leaky_relu(h)                                    # (tile_b, 256)

    # fc4: (256 -> 1) as f32 VPU multiply + lane reduction (avoids an N=1 MXU pass).
    # NOTE: the (tile_b, 1) store is lane-sparse; acceptable at the few grid steps
    # produced by the large batch tiles.
    out_ref[...] = jnp.sum(h * w4_ref[...], axis=-1, keepdims=True) + b4_ref[...]


def discriminator_forward(x, label, params):
    """x: (B, 1, H, W) float32 (NCHW); label: (B, n_classes) float32.

    params: 4 (W, b) pairs in logical (in_features, out_features) layout, as
    produced by init_params (matching the PyTorch nn.Linear stack).
    Returns (B, 1) float32, matching the PyTorch module's output shape.
    """
    B = x.shape[0]
    x_flat = x.reshape(B, -1)                       # free reshape, stays f32 in HBM
    n_classes = label.shape[-1]
    img_dim = x_flat.shape[-1]

    (w1, b1), (w2, b2), (w3, b3), (w4, b4) = params

    # --- kernel-layout params (split + zero-pad fc1 to 128 lanes + bf16) ------
    # O(params) one-time prep; in a real pipeline these would be hoisted/cached.
    pad1 = H1P - H1
    w1l_p = jnp.pad(w1[:n_classes], ((0, 0), (0, pad1))).astype(jnp.bfloat16)   # (n_classes, 128)
    w1i_p = jnp.pad(w1[n_classes:], ((0, 0), (0, pad1))).astype(jnp.bfloat16)   # (img_dim, 128)
    b1_p = jnp.pad(b1, ((0, 0), (0, pad1)))                                     # (1, 128) f32
    w2_p = jnp.pad(w2, ((0, pad1), (0, 0))).astype(jnp.bfloat16)                # (128, 128)
    w3_b = w3.astype(jnp.bfloat16)                                              # (128, 256)
    w4_row = w4.reshape(1, H3)                                                  # (1, 256) f32
    b4_s = b4.reshape(1, 1)                                                     # (1, 1) f32

    # --- batch tiling (ragged last tile handled by Pallas partial blocks) -----
    tile_b, n_tiles = _pick_batch_tile(B, img_dim, n_classes)
    vmem_limit = int(min(VMEM_LIMIT_CAP,
                         max(16 * 1024 * 1024,
                             _vmem_footprint(tile_b, img_dim, n_classes)
                             + 8 * 1024 * 1024)))

    def batch_spec(cols):
        return pl.BlockSpec((tile_b, cols), lambda i: (i, 0))

    def resident(shape):
        # Constant block index across the grid => weights stay VMEM-resident
        # (Pallas skips the re-DMA when the block index does not change).
        return pl.BlockSpec(shape, lambda i: (0, 0))

    out = pl.pallas_call(
        _discriminator_kernel,
        out_shape=jax.ShapeDtypeStruct((B, 1), jnp.float32),
        grid=(n_tiles,),
        in_specs=[
            batch_spec(n_classes),      # label          (tile_b, n_classes)  f32
            batch_spec(img_dim),        # x_flat         (tile_b, img_dim)    f32
            resident(w1l_p.shape),      # W1_label       (n_classes, 128)     bf16
            resident(w1i_p.shape),      # W1_img         (img_dim, 128)       bf16
            resident(b1_p.shape),       # b1             (1, 128)             f32
            resident(w2_p.shape),       # W2             (128, 128)           bf16
            resident(b2.shape),         # b2             (1, 128)             f32
            resident(w3_b.shape),       # W3             (128, 256)           bf16
            resident(b3.shape),         # b3             (1, 256)             f32
            resident(w4_row.shape),     # W4 (row)       (1, 256)             f32
            resident(b4_s.shape),       # b4             (1, 1)               f32
        ],
        out_specs=pl.BlockSpec((tile_b, 1), lambda i: (i, 0)),
        compiler_params=pltpu.CompilerParams(
            dimension_semantics=("parallel",),
            vmem_limit_bytes=vmem_limit,
        ),
    )(label, x_flat, w1l_p, w1i_p, b1_p, w2_p, b2, w3_b, b3, w4_row, b4_s)

    return out                                            # (B, 1)


def init_params(key, in_dim):
    """PyTorch nn.Linear-style init (U[-1/sqrt(fan_in), +1/sqrt(fan_in)]).

    Weights are stored transposed: (in_features, out_features).
    Biases are (1, out_features) for clean broadcasting inside the kernel.
    """
    dims = [in_dim, H1, H2, H3, 1]
    params = []
    for i in range(4):
        fan_in, fan_out = dims[i], dims[i + 1]
        key, kw, kb = jax.random.split(key, 3)
        bound = 1.0 / np.sqrt(fan_in)
        w = jax.random.uniform(kw, (fan_in, fan_out), jnp.float32, -bound, bound)
        b = jax.random.uniform(kb, (1, fan_out), jnp.float32, -bound, bound)
        params.append((w, b))
    return params


def reference_forward(x, label, params):
    """Pure-JAX reference mirroring the kernel's bf16-input / f32-accum math."""
    B = x.shape[0]
    h = jnp.concatenate([label, x.reshape(B, -1)], axis=-1)
    (w1, b1), (w2, b2), (w3, b3), (w4, b4) = params

    def lin_bf16(h, w, b):
        return jnp.dot(h.astype(jnp.bfloat16), w.astype(jnp.bfloat16),
                       preferred_element_type=jnp.float32) + b

    h = _leaky_relu(lin_bf16(h, w1, b1))
    h = _leaky_relu(lin_bf16(h, w2, b2))
    h = _leaky_relu(lin_bf16(h, w3, b3))
    return jnp.dot(h, w4, preferred_element_type=jnp.float32) + b4   # fc4 in f32


if __name__ == "__main__":
    # Small config: n_classes=8, img_shape=64 (a 1x8x8 image flattened).
    B, n_classes, H, W = 2, 8, 8, 8
    img_shape = H * W
    in_dim = n_classes + img_shape

    key = jax.random.PRNGKey(0)
    key, kx, kl = jax.random.split(key, 3)
    x = jax.random.normal(kx, (B, 1, H, W), jnp.float32)              # NCHW image
    label = jax.nn.one_hot(
        jax.random.randint(kl, (B,), 0, n_classes), n_classes
    ).astype(jnp.float32)

    params = init_params(key, in_dim)

    out = jax.block_until_ready(discriminator_forward(x, label, params))
    ref = jax.block_until_ready(reference_forward(x, label, params))

    assert out.shape == (B, 1)
    np.testing.assert_allclose(np.asarray(out), np.asarray(ref), rtol=1e-2, atol=1e-2)

    print("KERNEL_OK")
</pallas_src>

<mosaic_0001>
module attributes {stable_mosaic.version = 11 : i64} {
  func.func @_discriminator_kernel(%arg0: i32, %arg1: memref<8x8xf32, #tpu.memory_space<vmem>>, %arg2: memref<8x64xf32, #tpu.memory_space<vmem>>, %arg3: memref<8x128xbf16, #tpu.memory_space<vmem>>, %arg4: memref<64x128xbf16, #tpu.memory_space<vmem>>, %arg5: memref<1x128xf32, #tpu.memory_space<vmem>>, %arg6: memref<128x128xbf16, #tpu.memory_space<vmem>>, %arg7: memref<1x128xf32, #tpu.memory_space<vmem>>, %arg8: memref<128x256xbf16, #tpu.memory_space<vmem>>, %arg9: memref<1x256xf32, #tpu.memory_space<vmem>>, %arg10: memref<1x256xf32, #tpu.memory_space<vmem>>, %arg11: memref<1x1xf32, #tpu.memory_space<vmem>>, %arg12: memref<8x1xf32, #tpu.memory_space<vmem>>) attributes {dimension_semantics = [#tpu.dimension_semantics<parallel>], iteration_bounds = array<i64: 1>, scalar_prefetch = 0 : i64, scratch_operands = 0 : i64, tpu.core_type = #tpu.core_type<tc>, window_params = [{transform_indices = @transform_0, window_bounds = array<i64: 8, 8>}, {transform_indices = @transform_1, window_bounds = array<i64: 8, 64>}, {pipeline_mode = #tpu.pipeline_mode<synchronous>, transform_indices = @transform_2, window_bounds = array<i64: 8, 128>}, {pipeline_mode = #tpu.pipeline_mode<synchronous>, transform_indices = @transform_3, window_bounds = array<i64: 64, 128>}, {pipeline_mode = #tpu.pipeline_mode<synchronous>, transform_indices = @transform_4, window_bounds = array<i64: 1, 128>}, {pipeline_mode = #tpu.pipeline_mode<synchronous>, transform_indices = @transform_5, window_bounds = array<i64: 128, 128>}, {pipeline_mode = #tpu.pipeline_mode<synchronous>, transform_indices = @transform_6, window_bounds = array<i64: 1, 128>}, {pipeline_mode = #tpu.pipeline_mode<synchronous>, transform_indices = @transform_7, window_bounds = array<i64: 128, 256>}, {pipeline_mode = #tpu.pipeline_mode<synchronous>, transform_indices = @transform_8, window_bounds = array<i64: 1, 256>}, {pipeline_mode = #tpu.pipeline_mode<synchronous>, transform_indices = @transform_9, window_bounds = array<i64: 1, 256>}, {pipeline_mode = #tpu.pipeline_mode<synchronous>, transform_indices = @transform_10, window_bounds = array<i64: 1, 1>}, {transform_indices = @transform_11, window_bounds = array<i64: 8, 1>}]} {
    %c0 = arith.constant 0 : index
    %c0_0 = arith.constant 0 : index
    %0 = vector.load %arg2[%c0, %c0_0] : memref<8x64xf32, #tpu.memory_space<vmem>>, vector<8x64xf32>
    %1 = arith.truncf %0 : vector<8x64xf32> to vector<8x64xbf16>
    %c0_1 = arith.constant 0 : index
    %c0_2 = arith.constant 0 : index
    %2 = vector.load %arg1[%c0_1, %c0_2] : memref<8x8xf32, #tpu.memory_space<vmem>>, vector<8x8xf32>
    %3 = arith.truncf %2 : vector<8x8xf32> to vector<8x8xbf16>
    %c0_3 = arith.constant 0 : index
    %c0_4 = arith.constant 0 : index
    %4 = vector.load %arg4[%c0_3, %c0_4] : memref<64x128xbf16, #tpu.memory_space<vmem>>, vector<64x128xbf16>
    %cst = arith.constant dense<0.000000e+00> : vector<8x128xf32>
    %5 = tpu.matmul %1, %4, %cst {dimension_numbers = #tpu.dot_dimension_numbers<[1], [0], [0], [1], [0, 0, 1, 1], [], []>} : vector<8x64xbf16>, vector<64x128xbf16>, vector<8x128xf32> -> vector<8x128xf32>
    %c0_5 = arith.constant 0 : index
    %c0_6 = arith.constant 0 : index
    %6 = vector.load %arg3[%c0_5, %c0_6] : memref<8x128xbf16, #tpu.memory_space<vmem>>, vector<8x128xbf16>
    %cst_7 = arith.constant dense<0.000000e+00> : vector<8x128xf32>
    %7 = tpu.matmul %3, %6, %cst_7 {dimension_numbers = #tpu.dot_dimension_numbers<[1], [0], [0], [1], [0, 0, 1, 1], [], []>} : vector<8x8xbf16>, vector<8x128xbf16>, vector<8x128xf32> -> vector<8x128xf32>
    %8 = arith.addf %5, %7 : vector<8x128xf32>
    %c0_8 = arith.constant 0 : index
    %c0_9 = arith.constant 0 : index
    %9 = vector.load %arg5[%c0_8, %c0_9] : memref<1x128xf32, #tpu.memory_space<vmem>>, vector<1x128xf32>
    %10 = vector.broadcast %9 : vector<1x128xf32> to vector<8x128xf32>
    %11 = arith.addf %8, %10 : vector<8x128xf32>
    %cst_10 = arith.constant 0.000000e+00 : f32
    %12 = vector.broadcast %cst_10 : f32 to vector<8x128xf32>
    %13 = arith.cmpf ogt, %11, %12 : vector<8x128xf32>
    %cst_11 = arith.constant 2.000000e-01 : f32
    %14 = vector.broadcast %cst_11 : f32 to vector<8x128xf32>
    %15 = arith.mulf %14, %11 : vector<8x128xf32>
    %16 = arith.select %13, %11, %15 : vector<8x128xi1>, vector<8x128xf32>
    %17 = arith.truncf %16 : vector<8x128xf32> to vector<8x128xbf16>
    %c0_12 = arith.constant 0 : index
    %c0_13 = arith.constant 0 : index
    %18 = vector.load %arg6[%c0_12, %c0_13] : memref<128x128xbf16, #tpu.memory_space<vmem>>, vector<128x128xbf16>
    %cst_14 = arith.constant dense<0.000000e+00> : vector<8x128xf32>
    %19 = tpu.matmul %17, %18, %cst_14 {dimension_numbers = #tpu.dot_dimension_numbers<[1], [0], [0], [1], [0, 0, 1, 1], [], []>} : vector<8x128xbf16>, vector<128x128xbf16>, vector<8x128xf32> -> vector<8x128xf32>
    %c0_15 = arith.constant 0 : index
    %c0_16 = arith.constant 0 : index
    %20 = vector.load %arg7[%c0_15, %c0_16] : memref<1x128xf32, #tpu.memory_space<vmem>>, vector<1x128xf32>
    %21 = vector.broadcast %20 : vector<1x128xf32> to vector<8x128xf32>
    %22 = arith.addf %19, %21 : vector<8x128xf32>
    %cst_17 = arith.constant 0.000000e+00 : f32
    %23 = vector.broadcast %cst_17 : f32 to vector<8x128xf32>
    %24 = arith.cmpf ogt, %22, %23 : vector<8x128xf32>
    %cst_18 = arith.constant 2.000000e-01 : f32
    %25 = vector.broadcast %cst_18 : f32 to vector<8x128xf32>
    %26 = arith.mulf %25, %22 : vector<8x128xf32>
    %27 = arith.select %24, %22, %26 : vector<8x128xi1>, vector<8x128xf32>
    %28 = arith.truncf %27 : vector<8x128xf32> to vector<8x128xbf16>
    %c0_19 = arith.constant 0 : index
    %c0_20 = arith.constant 0 : index
    %29 = vector.load %arg8[%c0_19, %c0_20] : memref<128x256xbf16, #tpu.memory_space<vmem>>, vector<128x256xbf16>
    %cst_21 = arith.constant dense<0.000000e+00> : vector<8x256xf32>
    %30 = tpu.matmul %28, %29, %cst_21 {dimension_numbers = #tpu.dot_dimension_numbers<[1], [0], [0], [1], [0, 0, 1, 1], [], []>} : vector<8x128xbf16>, vector<128x256xbf16>, vector<8x256xf32> -> vector<8x256xf32>
    %c0_22 = arith.constant 0 : index
    %c0_23 = arith.constant 0 : index
    %31 = vector.load %arg9[%c0_22, %c0_23] : memref<1x256xf32, #tpu.memory_space<vmem>>, vector<1x256xf32>
    %32 = vector.broadcast %31 : vector<1x256xf32> to vector<8x256xf32>
    %33 = arith.addf %30, %32 : vector<8x256xf32>
    %cst_24 = arith.constant 0.000000e+00 : f32
    %34 = vector.broadcast %cst_24 : f32 to vector<8x256xf32>
    %35 = arith.cmpf ogt, %33, %34 : vector<8x256xf32>
    %cst_25 = arith.constant 2.000000e-01 : f32
    %36 = vector.broadcast %cst_25 : f32 to vector<8x256xf32>
    %37 = arith.mulf %36, %33 : vector<8x256xf32>
    %38 = arith.select %35, %33, %37 : vector<8x256xi1>, vector<8x256xf32>
    %c0_26 = arith.constant 0 : index
    %c0_27 = arith.constant 0 : index
    %39 = vector.load %arg10[%c0_26, %c0_27] : memref<1x256xf32, #tpu.memory_space<vmem>>, vector<1x256xf32>
    %40 = vector.broadcast %39 : vector<1x256xf32> to vector<8x256xf32>
    %41 = arith.mulf %38, %40 : vector<8x256xf32>
    %cst_28 = arith.constant dense<0.000000e+00> : vector<8xf32>
    %42 = vector.multi_reduction <add>, %41, %cst_28 [1] : vector<8x256xf32> to vector<8xf32>
    %43 = vector.shape_cast %42 : vector<8xf32> to vector<8x1xf32>
    %c0_29 = arith.constant 0 : index
    %c0_30 = arith.constant 0 : index
    %44 = vector.load %arg11[%c0_29, %c0_30] : memref<1x1xf32, #tpu.memory_space<vmem>>, vector<1x1xf32>
    %45 = vector.broadcast %44 : vector<1x1xf32> to vector<8x1xf32>
    %46 = arith.addf %43, %45 : vector<8x1xf32>
    %c0_31 = arith.constant 0 : index
    %c0_32 = arith.constant 0 : index
    %47 = vector.load %arg12[%c0_31, %c0_32] : memref<8x1xf32, #tpu.memory_space<vmem>>, vector<8x1xf32>
    tpu.vector_store %arg12[%c0_31, %c0_32], %46 {strides = array<i32>} : memref<8x1xf32, #tpu.memory_space<vmem>>, vector<8x1xf32>,
    return
  }
  func.func @transform_0(%arg0: i32) -> (i32, i32) {
    %c0_i32 = arith.constant 0 : i32
    %c0_i32_0 = arith.constant 0 : i32
    return %arg0, %c0_i32 : i32, i32
  }
  func.func @transform_1(%arg0: i32) -> (i32, i32) {
    %c0_i32 = arith.constant 0 : i32
    %c0_i32_0 = arith.constant 0 : i32
    return %arg0, %c0_i32 : i32, i32
  }
  func.func @transform_2(%arg0: i32) -> (i32, i32) {
    %c0_i32 = arith.constant 0 : i32
    %c0_i32_0 = arith.constant 0 : i32
    %c0_i32_1 = arith.constant 0 : i32
    return %c0_i32, %c0_i32_0 : i32, i32
  }
  func.func @transform_3(%arg0: i32) -> (i32, i32) {
    %c0_i32 = arith.constant 0 : i32
    %c0_i32_0 = arith.constant 0 : i32
    %c0_i32_1 = arith.constant 0 : i32
    return %c0_i32, %c0_i32_0 : i32, i32
  }
  func.func @transform_4(%arg0: i32) -> (i32, i32) {
    %c0_i32 = arith.constant 0 : i32
    %c0_i32_0 = arith.constant 0 : i32
    %c0_i32_1 = arith.constant 0 : i32
    return %c0_i32, %c0_i32_0 : i32, i32
  }
  func.func @transform_5(%arg0: i32) -> (i32, i32) {
    %c0_i32 = arith.constant 0 : i32
    %c0_i32_0 = arith.constant 0 : i32
    %c0_i32_1 = arith.constant 0 : i32
    return %c0_i32, %c0_i32_0 : i32, i32
  }
  func.func @transform_6(%arg0: i32) -> (i32, i32) {
    %c0_i32 = arith.constant 0 : i32
    %c0_i32_0 = arith.constant 0 : i32
    %c0_i32_1 = arith.constant 0 : i32
    return %c0_i32, %c0_i32_0 : i32, i32
  }
  func.func @transform_7(%arg0: i32) -> (i32, i32) {
    %c0_i32 = arith.constant 0 : i32
    %c0_i32_0 = arith.constant 0 : i32
    %c0_i32_1 = arith.constant 0 : i32
    return %c0_i32, %c0_i32_0 : i32, i32
  }
  func.func @transform_8(%arg0: i32) -> (i32, i32) {
    %c0_i32 = arith.constant 0 : i32
    %c0_i32_0 = arith.constant 0 : i32
    %c0_i32_1 = arith.constant 0 : i32
    return %c0_i32, %c0_i32_0 : i32, i32
  }
  func.func @transform_9(%arg0: i32) -> (i32, i32) {
    %c0_i32 = arith.constant 0 : i32
    %c0_i32_0 = arith.constant 0 : i32
    %c0_i32_1 = arith.constant 0 : i32
    return %c0_i32, %c0_i32_0 : i32, i32
  }
  func.func @transform_10(%arg0: i32) -> (i32, i32) {
    %c0_i32 = arith.constant 0 : i32
    %c0_i32_0 = arith.constant 0 : i32
    %c0_i32_1 = arith.constant 0 : i32
    return %c0_i32, %c0_i32_0 : i32, i32
  }
  func.func @transform_11(%arg0: i32) -> (i32, i32) {
    %c0_i32 = arith.constant 0 : i32
    %c0_i32_0 = arith.constant 0 : i32
    return %arg0, %c0_i32 : i32, i32
  }
}

</mosaic_0001>

<llo_original>
// kernel: tpu_custom_call.1
$region0: #{tpu_custom_call.1}
  #allocation0 [shape = 'u32[]', space=smem, size = 0x4, offset = 0x4, fixed_abs, tag = 'smem constant byte address 0x4 - core index']
  #allocation1 [shape = 'u32[144,128]{1,0:T(1,128)}', space=vmem, size = 0x12000, scoped, tag = 'internal scratch']
  #allocation2 [shape = 'f32[1,1]{1,0:T(1,128)S(1)}', space=vmem, size = 0x200, scoped, tag = 'scoped memory for tpu_custom_call.1']
  %s0 = inlined_call_operand.vmem [shape: f32[2,8], index: 0, kind: input, shape index: {}]
  %s1 = inlined_call_operand.hbm [shape: f32[2,64], index: 1, kind: input, shape index: {}]
  %s2 = inlined_call_operand.vmem [shape: bf16[8,128], index: 2, kind: input, shape index: {}]
  %s3 = inlined_call_operand.hbm [shape: bf16[64,128], index: 3, kind: input, shape index: {}]
  %s4 = inlined_call_operand.vmem [shape: f32[1,128], index: 4, kind: input, shape index: {}]
  %s5 = inlined_call_operand.hbm [shape: bf16[128,128], index: 5, kind: input, shape index: {}]
  %s6 = inlined_call_operand.vmem [shape: f32[1,128], index: 6, kind: input, shape index: {}]
  %s7 = inlined_call_operand.hbm [shape: bf16[128,256], index: 7, kind: input, shape index: {}]
  %s8 = inlined_call_operand.vmem [shape: f32[1,256], index: 8, kind: input, shape index: {}]
  %s9 = inlined_call_operand.vmem [shape: f32[1,256], index: 9, kind: input, shape index: {}]
  %s10 = inlined_call_operand.<no memory space> [shape: f32[1,1], index: 10, kind: input, shape index: {}]
  %s11 = inlined_call_operand.vmem [shape: f32[2,1], index: 11, kind: output, shape index: {}]
  %s12 = sld [smem:[#allocation0]]
  $region100: #{tpu_custom_call.1} parent=0
    _
  %s14 = ssub.s32 1, %s12
  %s15 = scalar_select 0, %s14, %s12
  %v16 = vstv %s10
  %17 = vst [vmem:[#allocation2] sm:$0x1] %v16
  $region1: #{tpu_custom_call.1} parent=0
    #allocation3 [shape = 'u8[4096]{0}', space=vmem, size = 0x1000, scoped, tag = 'input window, operand 1, single buffered']
    #allocation4 [shape = 's32[1]{0}', space=sflag, size = 0x4, scoped, tag = 'scoped memory for tpu_custom_call.1']
    #allocation5 [shape = 'u8[16384]{0}', space=vmem, size = 0x4000, scoped, tag = 'input window, operand 3, single buffered']
    #allocation6 [shape = 's32[1]{0}', space=sflag, size = 0x4, scoped, tag = 'scoped memory for tpu_custom_call.1']
    #allocation7 [shape = 'u8[32768]{0}', space=vmem, size = 0x8000, scoped, tag = 'input window, operand 5, single buffered']
    #allocation8 [shape = 'u8[65536]{0}', space=vmem, size = 0x10000, scoped, tag = 'input window, operand 7, single buffered']
    #allocation9 [shape = 's32[1]{0}', space=sflag, size = 0x4, scoped, tag = 'scoped memory for tpu_custom_call.1']
    #allocation10 [shape = 'u8[4096]{0}', space=vmem, size = 0x1000, scoped, tag = 'output window, operand 0, single buffered']
    %18 = vsyncpa [#allocation4], 0
    %19 = vsyncpa [#allocation6], 0
    %20 = vsyncpa [#allocation9], 0
    // Predicated region
    $region2: #{tpu_custom_call.1} parent=1 // pred_check
      _
    $region3: #{tpu_custom_call.1} parent=1 // pred_check_branch
      %22 = sbr.rel (0) target = $region5
    $region4: #{tpu_custom_call.1} parent=1 // pred_region
      _
    $region5: #{tpu_custom_call.1} parent=1 // pred_fallthru
      _
    // Predicated region
    $region6: #{tpu_custom_call.1} parent=1 // pred_check
      _
    $region7: #{tpu_custom_call.1} parent=1 // pred_check_branch
      %24 = sbr.rel (0) target = $region9
    $region8: #{tpu_custom_call.1} parent=1 // pred_region
      %s26 = ssub.s32 128, 32
      %27 = vsyncadd [#allocation4], %s26
      %s28 = sshll.u32 [#allocation3], 4
      %s29 = int_to_ptr.vmem [resolvable:$true] %s28
      %34 = dma.hbm_to_vmem [thread:$0]  %s1, 32, %s29, [#allocation4], 32, 32, 2
    $region9: #{tpu_custom_call.1} parent=1 // pred_fallthru
      _
    // Predicated region
    $region10: #{tpu_custom_call.1} parent=1 // pred_check
      _
    $region11: #{tpu_custom_call.1} parent=1 // pred_check_branch
      %36 = sbr.rel (0) target = $region13
    $region12: #{tpu_custom_call.1} parent=1 // pred_region
      _
    $region13: #{tpu_custom_call.1} parent=1 // pred_fallthru
      _
    // Predicated region
    $region14: #{tpu_custom_call.1} parent=1 // pred_check
      _
    $region15: #{tpu_custom_call.1} parent=1 // pred_check_branch
      %38 = sbr.rel (0) target = $region17
    $region16: #{tpu_custom_call.1} parent=1 // pred_region
      %s40 = ssub.s32 512, 512
      %41 = vsyncadd [#allocation6], %s40
      %s42 = sshll.u32 [#allocation5], 4
      %s43 = int_to_ptr.vmem [resolvable:$true] %s42
      %48 = dma.hbm_to_vmem [thread:$0]  %s3, 512, %s43, [#allocation6], 64, 64, 4
    $region17: #{tpu_custom_call.1} parent=1 // pred_fallthru
      _
    // Predicated region
    $region18: #{tpu_custom_call.1} parent=1 // pred_check
      _
    $region19: #{tpu_custom_call.1} parent=1 // pred_check_branch
      %50 = sbr.rel (0) target = $region21
    $region20: #{tpu_custom_call.1} parent=1 // pred_region
      _
    $region21: #{tpu_custom_call.1} parent=1 // pred_fallthru
      _
    // Predicated region
    $region22: #{tpu_custom_call.1} parent=1 // pred_check
      _
    $region23: #{tpu_custom_call.1} parent=1 // pred_check_branch
      %52 = sbr.rel (0) target = $region25
    $region24: #{tpu_custom_call.1} parent=1 // pred_region
      %s54 = ssub.s32 1024, 1024
      %55 = vsyncadd [#allocation6], %s54
      %s56 = sshll.u32 [#allocation7], 4
      %s57 = int_to_ptr.vmem [resolvable:$true] %s56
      %62 = dma.hbm_to_vmem [thread:$0]  %s5, 1024, %s57, [#allocation6], 64, 64, 4
    $region25: #{tpu_custom_call.1} parent=1 // pred_fallthru
      _
    // Predicated region
    $region26: #{tpu_custom_call.1} parent=1 // pred_check
      _
    $region27: #{tpu_custom_call.1} parent=1 // pred_check_branch
      %64 = sbr.rel (0) target = $region29
    $region28: #{tpu_custom_call.1} parent=1 // pred_region
      _
    $region29: #{tpu_custom_call.1} parent=1 // pred_fallthru
      _
    // Predicated region
    $region30: #{tpu_custom_call.1} parent=1 // pred_check
      _
    $region31: #{tpu_custom_call.1} parent=1 // pred_check_branch
      %66 = sbr.rel (0) target = $region33
    $region32: #{tpu_custom_call.1} parent=1 // pred_region
      %s68 = ssub.s32 2048, 2048
      %69 = vsyncadd [#allocation9], %s68
      %s70 = sshll.u32 [#allocation8], 4
      %s71 = int_to_ptr.vmem [resolvable:$true] %s70
      %76 = dma.hbm_to_vmem [thread:$0]  %s7, 2048, %s71, [#allocation9], 128, 128, 8
    $region33: #{tpu_custom_call.1} parent=1 // pred_fallthru
      _
    // Predicated region
    $region34: #{tpu_custom_call.1} parent=1 // pred_check
      _
    $region35: #{tpu_custom_call.1} parent=1 // pred_check_branch
      %78 = sbr.rel (0) target = $region37
    $region36: #{tpu_custom_call.1} parent=1 // pred_region
      _
    $region37: #{tpu_custom_call.1} parent=1 // pred_fallthru
      _
    // Predicated region
    $region38: #{tpu_custom_call.1} parent=1 // pred_check
      _
    $region39: #{tpu_custom_call.1} parent=1 // pred_check_branch
      %80 = sbr.rel (0) target = $region41
    $region40: #{tpu_custom_call.1} parent=1 // pred_region
      _
    $region41: #{tpu_custom_call.1} parent=1 // pred_fallthru
      _
    // Predicated region
    $region42: #{tpu_custom_call.1} parent=1 // pred_check
      _
    $region43: #{tpu_custom_call.1} parent=1 // pred_check_branch
      %82 = sbr.rel (0) target = $region45
    $region44: #{tpu_custom_call.1} parent=1 // pred_region
      _
    $region45: #{tpu_custom_call.1} parent=1 // pred_fallthru
      _
    // Predicated region
    $region46: #{tpu_custom_call.1} parent=1 // pred_check
      _
    $region47: #{tpu_custom_call.1} parent=1 // pred_check_branch
      %84 = sbr.rel (0) target = $region49
    $region48: #{tpu_custom_call.1} parent=1 // pred_region
      %85 = dma.done [#allocation4], 128
    $region49: #{tpu_custom_call.1} parent=1 // pred_fallthru
      _
    // Predicated region
    $region50: #{tpu_custom_call.1} parent=1 // pred_check
      _
    $region51: #{tpu_custom_call.1} parent=1 // pred_check_branch
      %87 = sbr.rel (0) target = $region53
    $region52: #{tpu_custom_call.1} parent=1 // pred_region
      %88 = dma.done [#allocation6], 512
    $region53: #{tpu_custom_call.1} parent=1 // pred_fallthru
      _
    // Predicated region
    $region54: #{tpu_custom_call.1} parent=1 // pred_check
      _
    $region55: #{tpu_custom_call.1} parent=1 // pred_check_branch
      %90 = sbr.rel (0) target = $region57
    $region56: #{tpu_custom_call.1} parent=1 // pred_region
      %91 = dma.done [#allocation6], 1024
    $region57: #{tpu_custom_call.1} parent=1 // pred_fallthru
      _
    // Predicated region
    $region58: #{tpu_custom_call.1} parent=1 // pred_check
      _
    $region59: #{tpu_custom_call.1} parent=1 // pred_check_branch
      %93 = sbr.rel (0) target = $region61
    $region60: #{tpu_custom_call.1} parent=1 // pred_region
      %94 = dma.done [#allocation9], 2048
    $region61: #{tpu_custom_call.1} parent=1 // pred_fallthru
      _
    %v96 = vld [vmem:[#allocation3] sm:$0xff]
    %v97 = vpack.c.bf16 %v96, %v96
    %v98 = vld [vmem:[%s0] sm:$0xff]
    %v99 = vpack.c.bf16 %v98, %v98
    %v100 = vld [vmem:[#allocation5] sm:$0xf]
    %v101 = vld [vmem:[#allocation5 + $0x4] sm:$0xf]
    %v102 = vld [vmem:[#allocation5 + $0x8] sm:$0xf]
    %v103 = vld [vmem:[#allocation5 + $0xc] sm:$0xf]
    %v104 = vld [vmem:[#allocation5 + $0x10] sm:$0xf]
    %v105 = vld [vmem:[#allocation5 + $0x14] sm:$0xf]
    %v106 = vld [vmem:[#allocation5 + $0x18] sm:$0xf]
    %v107 = vld [vmem:[#allocation5 + $0x1c] sm:$0xf]
    %v108 = vld [vmem:[%s2] sm:$0xf]
    %vm109 = vcmask 64512
    %v111 = vsel %vm109, %v99, 0
    %vm113 = vcmask 1043456
    %v115 = vsel %vm113, %v108, 0
    %117 = vmatprep.subr.bf16.mxu0 0
    %118 = vmatpush1.bf16.msra.mxu0 %v115
    %119 = vmatprep.subr.bf16.mxu0 0
    %120 = vmatpush1.bf16.msra.mxu0 0
    %121 = vmatprep.subr.bf16.mxu0 0
    %122 = vmatpush1.bf16.msra.mxu0 0
    %123 = vmatprep.subr.bf16.mxu0 0
    %124 = vmatpush1.bf16.msra.mxu0 0
    %125 = vmatprep.subr.bf16.mxu0 0
    %126 = vmatpush1.bf16.msra.mxu0 0
    %127 = vmatprep.subr.bf16.mxu0 0
    %128 = vmatpush1.bf16.msra.mxu0 0
    %129 = vmatprep.subr.bf16.mxu0 0
    %130 = vmatpush1.bf16.msra.mxu0 0
    %131 = vmatprep.subr.bf16.mxu0 0
    %132 = vmatpush1.bf16.msra.mxu0 0
    %133 = vmatprep.subr.bf16.mxu0 0
    %134 = vmatpush1.bf16.msra.mxu0 0
    %135 = vmatprep.subr.bf16.mxu0 0
    %136 = vmatpush1.bf16.msra.mxu0 0
    %137 = vmatprep.subr.bf16.mxu0 0
    %138 = vmatpush1.bf16.msra.mxu0 0
    %139 = vmatprep.subr.bf16.mxu0 0
    %140 = vmatpush1.bf16.msra.mxu0 0
    %141 = vmatprep.subr.bf16.mxu0 0
    %142 = vmatpush1.bf16.msra.mxu0 0
    %143 = vmatprep.subr.bf16.mxu0 0
    %144 = vmatpush1.bf16.msra.mxu0 0
    %145 = vmatprep.subr.bf16.mxu0 0
    %146 = vmatpush1.bf16.msra.mxu0 0
    %147 = vmatprep.subr.bf16.mxu0 0
    %148 = vmatpush1.bf16.msra.mxu0 0
    %149 = vmatprep.mubr.bf16.mxu0 0
    %150 = vmatmul.mubr.bf16.gmra.mrb[0].mxu0 %v111
    %v151 = vpop.f32.mrb[0].mxu0
    %v152 = vadd.f32 0.0, %v151
    %v153 = vpop.f32.mrb[0].mxu0
    %v154 = vpop.f32.mrb[0].mxu0
    %v155 = vpop.f32.mrb[0].mxu0
    %156 = vdwg.mxu0
    %v165 = vunpack.c.l.b16 %v100
    %v166 = vunpack.c.l.b16 %v101
    %v167 = vunpack.c.l.b16 %v102
    %v168 = vunpack.c.l.b16 %v103
    %v169 = vunpack.c.l.b16 %v104
    %v170 = vunpack.c.l.b16 %v105
    %v171 = vunpack.c.l.b16 %v106
    %v172 = vunpack.c.l.b16 %v107
    %v173 = vpack.c.b16 %v166, %v165
    %v174 = vpack.c.b16 %v168, %v167
    %v175 = vpack.c.b16 %v170, %v169
    %v176 = vpack.c.b16 %v172, %v171
    %vm181 = vcmask 523264
    %v183 = vsel %vm181, %v97, 0
    %185 = vmatprep.subr.bf16.mxu0 0
    %186 = vmatpush1.bf16.msra.mxu0 %v173
    %187 = vmatprep.subr.bf16.mxu0 0
    %188 = vmatpush1.bf16.msra.mxu0 %v174
    %189 = vmatprep.subr.bf16.mxu0 0
    %190 = vmatpush1.bf16.msra.mxu0 %v175
    %191 = vmatprep.subr.bf16.mxu0 0
    %192 = vmatpush1.bf16.msra.mxu0 %v176
    %193 = vmatprep.subr.bf16.mxu0 0
    %194 = vmatpush1.bf16.msra.mxu0 0
    %195 = vmatprep.subr.bf16.mxu0 0
    %196 = vmatpush1.bf16.msra.mxu0 0
    %197 = vmatprep.subr.bf16.mxu0 0
    %198 = vmatpush1.bf16.msra.mxu0 0
    %199 = vmatprep.subr.bf16.mxu0 0
    %200 = vmatpush1.bf16.msra.mxu0 0
    %201 = vmatprep.subr.bf16.mxu0 0
    %202 = vmatpush1.bf16.msra.mxu0 0
    %203 = vmatprep.subr.bf16.mxu0 0
    %204 = vmatpush1.bf16.msra.mxu0 0
    %205 = vmatprep.subr.bf16.mxu0 0
    %206 = vmatpush1.bf16.msra.mxu0 0
    %207 = vmatprep.subr.bf16.mxu0 0
    %208 = vmatpush1.bf16.msra.mxu0 0
    %209 = vmatprep.subr.bf16.mxu0 0
    %210 = vmatpush1.bf16.msra.mxu0 0
    %211 = vmatprep.subr.bf16.mxu0 0
    %212 = vmatpush1.bf16.msra.mxu0 0
    %213 = vmatprep.subr.bf16.mxu0 0
    %214 = vmatpush1.bf16.msra.mxu0 0
    %215 = vmatprep.subr.bf16.mxu0 0
    %216 = vmatpush1.bf16.msra.mxu0 0
    %217 = vmatprep.mubr.bf16.mxu0 0
    %218 = vmatmul.mubr.bf16.gmra.mrb[0].mxu0 %v183
    %v219 = vpop.f32.mrb[0].mxu0
    %v220 = vadd.f32 %v152, %v219
    %v221 = vpop.f32.mrb[0].mxu0
    %v222 = vpop.f32.mrb[0].mxu0
    %v223 = vpop.f32.mrb[0].mxu0
    %224 = vdwg.mxu0
    %v225 = vld [vmem:[%s4] sm:$0x1]
    %v227 = vlaneseq
    %v228 = vshrl.u32 %v227, 7
    %v229 = vsub.s32 0, %v228
    %v230 = vrot.slane %v225, %v229
    %v232 = vadd.f32 %v220, %v230
    %vm233 = vcmp.gt.f32.partialorder %v232, 0.0
    %v234 = vmul.f32 %v232, 0.2
    %v235 = vsel %vm233, %v232, %v234
    %v236 = vpack.c.bf16 %v235, %v235
    %v237 = vld [vmem:[#allocation7] sm:$0xf]
    %v238 = vld [vmem:[#allocation7 + $0x4] sm:$0xf]
    %v239 = vld [vmem:[#allocation7 + $0x8] sm:$0xf]
    %v240 = vld [vmem:[#allocation7 + $0xc] sm:$0xf]
    %v241 = vld [vmem:[#allocation7 + $0x10] sm:$0xf]
    %v242 = vld [vmem:[#allocation7 + $0x14] sm:$0xf]
    %v243 = vld [vmem:[#allocation7 + $0x18] sm:$0xf]
    %v244 = vld [vmem:[#allocation7 + $0x1c] sm:$0xf]
    %v245 = vld [vmem:[#allocation7 + $0x20] sm:$0xf]
    %v246 = vld [vmem:[#allocation7 + $0x24] sm:$0xf]
    %v247 = vld [vmem:[#allocation7 + $0x28] sm:$0xf]
    %v248 = vld [vmem:[#allocation7 + $0x2c] sm:$0xf]
    %v249 = vld [vmem:[#allocation7 + $0x30] sm:$0xf]
    %v250 = vld [vmem:[#allocation7 + $0x34] sm:$0xf]
    %v251 = vld [vmem:[#allocation7 + $0x38] sm:$0xf]
    %v252 = vld [vmem:[#allocation7 + $0x3c] sm:$0xf]
    %v253 = vld [vmem:[%s6] sm:$0x1]
    %v255 = vlaneseq
    %v256 = vshrl.u32 %v255, 7
    %v257 = vsub.s32 0, %v256
    %v258 = vrot.slane %v253, %v257
    %v276 = vunpack.c.l.b16 %v237
    %v277 = vunpack.c.l.b16 %v238
    %v278 = vunpack.c.l.b16 %v239
    %v279 = vunpack.c.l.b16 %v240
    %v280 = vunpack.c.l.b16 %v241
    %v281 = vunpack.c.l.b16 %v242
    %v282 = vunpack.c.l.b16 %v243
    %v283 = vunpack.c.l.b16 %v244
    %v284 = vunpack.c.l.b16 %v245
    %v285 = vunpack.c.l.b16 %v246
    %v286 = vunpack.c.l.b16 %v247
    %v287 = vunpack.c.l.b16 %v248
    %v288 = vunpack.c.l.b16 %v249
    %v289 = vunpack.c.l.b16 %v250
    %v290 = vunpack.c.l.b16 %v251
    %v291 = vunpack.c.l.b16 %v252
    %v292 = vpack.c.b16 %v277, %v276
    %v293 = vpack.c.b16 %v279, %v278
    %v294 = vpack.c.b16 %v281, %v280
    %v295 = vpack.c.b16 %v283, %v282
    %v296 = vpack.c.b16 %v285, %v284
    %v297 = vpack.c.b16 %v287, %v286
    %v298 = vpack.c.b16 %v289, %v288
    %v299 = vpack.c.b16 %v291, %v290
    %308 = vmatprep.subr.bf16.mxu0 0
    %309 = vmatpush1.bf16.msra.mxu0 %v292
    %310 = vmatprep.subr.bf16.mxu0 0
    %311 = vmatpush1.bf16.msra.mxu0 %v293
    %312 = vmatprep.subr.bf16.mxu0 0
    %313 = vmatpush1.bf16.msra.mxu0 %v294
    %314 = vmatprep.subr.bf16.mxu0 0
    %315 = vmatpush1.bf16.msra.mxu0 %v295
    %316 = vmatprep.subr.bf16.mxu0 0
    %317 = vmatpush1.bf16.msra.mxu0 %v296
    %318 = vmatprep.subr.bf16.mxu0 0
    %319 = vmatpush1.bf16.msra.mxu0 %v297
    %320 = vmatprep.subr.bf16.mxu0 0
    %321 = vmatpush1.bf16.msra.mxu0 %v298
    %322 = vmatprep.subr.bf16.mxu0 0
    %323 = vmatpush1.bf16.msra.mxu0 %v299
    %324 = vmatprep.subr.bf16.mxu0 0
    %325 = vmatpush1.bf16.msra.mxu0 0
    %326 = vmatprep.subr.bf16.mxu0 0
    %327 = vmatpush1.bf16.msra.mxu0 0
    %328 = vmatprep.subr.bf16.mxu0 0
    %329 = vmatpush1.bf16.msra.mxu0 0
    %330 = vmatprep.subr.bf16.mxu0 0
    %331 = vmatpush1.bf16.msra.mxu0 0
    %332 = vmatprep.subr.bf16.mxu0 0
    %333 = vmatpush1.bf16.msra.mxu0 0
    %334 = vmatprep.subr.bf16.mxu0 0
    %335 = vmatpush1.bf16.msra.mxu0 0
    %336 = vmatprep.subr.bf16.mxu0 0
    %337 = vmatpush1.bf16.msra.mxu0 0
    %338 = vmatprep.subr.bf16.mxu0 0
    %339 = vmatpush1.bf16.msra.mxu0 0
    %340 = vmatprep.mubr.bf16.mxu0 0
    %341 = vmatmul.mubr.bf16.gmra.mrb[0].mxu0 %v236
    %v342 = vpop.f32.mrb[0].mxu0
    %v343 = vadd.f32 %v258, %v342
    %v344 = vpop.f32.mrb[0].mxu0
    %v345 = vpop.f32.mrb[0].mxu0
    %v346 = vpop.f32.mrb[0].mxu0
    %347 = vdwg.mxu0
    %vm348 = vcmp.gt.f32.partialorder %v343, 0.0
    %v349 = vmul.f32 %v343, 0.2
    %v350 = vsel %vm348, %v343, %v349
    %v351 = vpack.c.bf16 %v350, %v350
    %v352 = vld [vmem:[#allocation8] sm:$0xff]
    %v353 = vld [vmem:[#allocation8 + $0x8] sm:$0xff]
    %v354 = vld [vmem:[#allocation8 + $0x10] sm:$0xff]
    %v355 = vld [vmem:[#allocation8 + $0x18] sm:$0xff]
    %v356 = vld [vmem:[#allocation8 + $0x20] sm:$0xff]
    %v357 = vld [vmem:[#allocation8 + $0x28] sm:$0xff]
    %v358 = vld [vmem:[#allocation8 + $0x30] sm:$0xff]
    %v359 = vld [vmem:[#allocation8 + $0x38] sm:$0xff]
    %v360 = vld [vmem:[#allocation8 + $0x40] sm:$0xff]
    %v361 = vld [vmem:[#allocation8 + $0x48] sm:$0xff]
    %v362 = vld [vmem:[#allocation8 + $0x50] sm:$0xff]
    %v363 = vld [vmem:[#allocation8 + $0x58] sm:$0xff]
    %v364 = vld [vmem:[#allocation8 + $0x60] sm:$0xff]
    %v365 = vld [vmem:[#allocation8 + $0x68] sm:$0xff]
    %v366 = vld [vmem:[#allocation8 + $0x70] sm:$0xff]
    %v367 = vld [vmem:[#allocation8 + $0x78] sm:$0xff]
    %v368 = vld [vmem:[%s8] sm:$0x3]
    %v370 = vlaneseq
    %v371 = vshrl.u32 %v370, 7
    %v372 = vsub.s32 0, %v371
    %v373 = vrot.slane %v368, %v372
    %v374 = vlaneseq
    %v375 = vshrl.u32 %v374, 7
    %v376 = vsub.s32 1, %v375
    %v377 = vrot.slane %v368, %v376
    %v396 = vunpack.c.l.b16 %v352
    %v397 = vunpack.c.h.b16 %v352
    %v398 = vunpack.c.l.b16 %v353
    %v399 = vunpack.c.h.b16 %v353
    %v400 = vunpack.c.l.b16 %v354
    %v401 = vunpack.c.h.b16 %v354
    %v402 = vunpack.c.l.b16 %v355
    %v403 = vunpack.c.h.b16 %v355
    %v404 = vunpack.c.l.b16 %v356
    %v405 = vunpack.c.h.b16 %v356
    %v406 = vunpack.c.l.b16 %v357
    %v407 = vunpack.c.h.b16 %v357
    %v408 = vunpack.c.l.b16 %v358
    %v409 = vunpack.c.h.b16 %v358
    %v410 = vunpack.c.l.b16 %v359
    %v411 = vunpack.c.h.b16 %v359
    %v412 = vunpack.c.l.b16 %v360
    %v413 = vunpack.c.h.b16 %v360
    %v414 = vunpack.c.l.b16 %v361
    %v415 = vunpack.c.h.b16 %v361
    %v416 = vunpack.c.l.b16 %v362
    %v417 = vunpack.c.h.b16 %v362
    %v418 = vunpack.c.l.b16 %v363
    %v419 = vunpack.c.h.b16 %v363
    %v420 = vunpack.c.l.b16 %v364
    %v421 = vunpack.c.h.b16 %v364
    %v422 = vunpack.c.l.b16 %v365
    %v423 = vunpack.c.h.b16 %v365
    %v424 = vunpack.c.l.b16 %v366
    %v425 = vunpack.c.h.b16 %v366
    %v426 = vunpack.c.l.b16 %v367
    %v427 = vunpack.c.h.b16 %v367
    %v428 = vpack.c.b16 %v398, %v396
    %v429 = vpack.c.b16 %v399, %v397
    %v430 = vpack.c.b16 %v402, %v400
    %v431 = vpack.c.b16 %v403, %v401
    %v432 = vpack.c.b16 %v406, %v404
    %v433 = vpack.c.b16 %v407, %v405
    %v434 = vpack.c.b16 %v410, %v408
    %v435 = vpack.c.b16 %v411, %v409
    %v436 = vpack.c.b16 %v414, %v412
    %v437 = vpack.c.b16 %v415, %v413
    %v438 = vpack.c.b16 %v418, %v416
    %v439 = vpack.c.b16 %v419, %v417
    %v440 = vpack.c.b16 %v422, %v420
    %v441 = vpack.c.b16 %v423, %v421
    %v442 = vpack.c.b16 %v426, %v424
    %v443 = vpack.c.b16 %v427, %v425
    %460 = vmatprep.subr.bf16.mxu0 %v429
    %461 = vmatpush1.bf16.msra.mxu0 %v428
    %462 = vmatprep.subr.bf16.mxu0 %v431
    %463 = vmatpush1.bf16.msra.mxu0 %v430
    %464 = vmatprep.subr.bf16.mxu0 %v433
    %465 = vmatpush1.bf16.msra.mxu0 %v432
    %466 = vmatprep.subr.bf16.mxu0 %v435
    %467 = vmatpush1.bf16.msra.mxu0 %v434
    %468 = vmatprep.subr.bf16.mxu0 %v437
    %469 = vmatpush1.bf16.msra.mxu0 %v436
    %470 = vmatprep.subr.bf16.mxu0 %v439
    %471 = vmatpush1.bf16.msra.mxu0 %v438
    %472 = vmatprep.subr.bf16.mxu0 %v441
    %473 = vmatpush1.bf16.msra.mxu0 %v440
    %474 = vmatprep.subr.bf16.mxu0 %v443
    %475 = vmatpush1.bf16.msra.mxu0 %v442
    %476 = vmatprep.subr.bf16.mxu0 0
    %477 = vmatpush1.bf16.msra.mxu0 0
    %478 = vmatprep.subr.bf16.mxu0 0
    %479 = vmatpush1.bf16.msra.mxu0 0
    %480 = vmatprep.subr.bf16.mxu0 0
    %481 = vmatpush1.bf16.msra.mxu0 0
    %482 = vmatprep.subr.bf16.mxu0 0
    %483 = vmatpush1.bf16.msra.mxu0 0
    %484 = vmatprep.subr.bf16.mxu0 0
    %485 = vmatpush1.bf16.msra.mxu0 0
    %486 = vmatprep.subr.bf16.mxu0 0
    %487 = vmatpush1.bf16.msra.mxu0 0
    %488 = vmatprep.subr.bf16.mxu0 0
    %489 = vmatpush1.bf16.msra.mxu0 0
    %490 = vmatprep.subr.bf16.mxu0 0
    %491 = vmatpush1.bf16.msra.mxu0 0
    %492 = vmatprep.mubr.bf16.mxu0 0
    %493 = vmatmul.mubr.bf16.gmra.mrb[0].mxu0 %v351
    %v494 = vpop.f32.mrb[0].mxu0
    %v495 = vadd.f32 %v373, %v494
    %v496 = vpop.f32.mrb[0].mxu0
    %v497 = vadd.f32 %v377, %v496
    %v498 = vpop.f32.mrb[0].mxu0
    %v499 = vpop.f32.mrb[0].mxu0
    %500 = vdwg.mxu0
    %vm501 = vcmp.gt.f32.partialorder %v495, 0.0
    %vm502 = vcmp.gt.f32.partialorder %v497, 0.0
    %v503 = vmul.f32 %v495, 0.2
    %v504 = vmul.f32 %v497, 0.2
    %v505 = vsel %vm501, %v495, %v503
    %v506 = vsel %vm502, %v497, %v504
    %v507 = vld [vmem:[%s9] sm:$0x3]
    %v509 = vlaneseq
    %v510 = vshrl.u32 %v509, 7
    %v511 = vsub.s32 0, %v510
    %v512 = vrot.slane %v507, %v511
    %v513 = vlaneseq
    %v514 = vshrl.u32 %v513, 7
    %v515 = vsub.s32 1, %v514
    %v516 = vrot.slane %v507, %v515
    %v519 = vmul.f32 %v505, %v512
    %v520 = vmul.f32 %v506, %v516
    %v521 = vadd.f32 %v519, %v520
    %522 = vadd.xlane.f32.xlu0 %v521
    %v523 = vpop.xlane.xlu0 %522
    %v524 = vld [vmem:[#allocation2] sm:$0x1]
    %v526 = vlaneseq
    %v527 = vshrl.u32 %v526, 7
    %v528 = vsub.s32 0, %v527
    %v529 = vrot.slane %v524, %v528
    %v531 = vadd.f32 %v523, %v529
    %vm532 = vcmask 7168
    %533 = vst.msk [vmem:[#allocation10] sm:$0xff] %vm532, %v531
    // Predicated region
    $region62: #{tpu_custom_call.1} parent=1 // pred_check
      _
    $region63: #{tpu_custom_call.1} parent=1 // pred_check_branch
      %535 = sbr.rel (0) target = $region65
    $region64: #{tpu_custom_call.1} parent=1 // pred_region
      // Predicated region
      $region66: #{tpu_custom_call.1} parent=64 // pred_check
        _
      $region67: #{tpu_custom_call.1} parent=64 // pred_check_branch
        %537 = sbr.rel (0) target = $region69
      $region68: #{tpu_custom_call.1} parent=64 // pred_region
        // Predicated region
        $region70: #{tpu_custom_call.1} parent=68 // pred_check
          _
        $region71: #{tpu_custom_call.1} parent=68 // pred_check_branch
          %539 = sbr.rel target = $region73
        $region72: #{tpu_custom_call.1} parent=68 // pred_region
          // Predicated region
          $region85: #{tpu_custom_call.1} parent=72 // pred_check
            _
          $region86: #{tpu_custom_call.1} parent=72 // pred_check_branch
            %554 = sbr.rel (0) target = $region88
          $region87: #{tpu_custom_call.1} parent=72 // pred_region
            loop: start=0, step=1, limit=1
            $region89: #{tpu_custom_call.1} parent=87 // loop_pre_header
              _
            $region90: #{tpu_custom_call.1} parent=87 // loop_header
              %s557 = sphi 0, %s561
              %p558 = scmp.ge.s32.totalorder %s557, 1
              %s562 = sphi [#allocation10], [#allocation10]
              %s563 = sphi %s11, %s11
            $region91: #{tpu_custom_call.1} parent=87 // loop_header_branch
              %560 = sbr.rel (%p558) target = $region95
            $region92: #{tpu_custom_call.1} parent=87 // loop_body
              %v564 = vld [vmem:[%s562] sm:$0x3]
              %565 = vst [vmem:[%s563] sm:$0x3] %v564
            $region93: #{tpu_custom_call.1} parent=87 // loop_footer
              %s561 = sadd.s32 1, %s557
            $region94: #{tpu_custom_call.1} parent=87 // loop_footer_branch
              %556 = sbr.rel target = $region90
            $region95: #{tpu_custom_call.1} parent=87 // loop_exit
              _
          $region88: #{tpu_custom_call.1} parent=72 // pred_fallthru
            _
        $region73: #{tpu_custom_call.1} parent=68 // pred_fallthru
          _
        // Predicated region
        $region74: #{tpu_custom_call.1} parent=68 // pred_check
          _
        $region75: #{tpu_custom_call.1} parent=68 // pred_check_branch
          %541 = sbr.rel (0) target = $region77
        $region76: #{tpu_custom_call.1} parent=68 // pred_region
          loop: start=0, step=1, limit=1
          $region78: #{tpu_custom_call.1} parent=76 // loop_pre_header
            _
          $region79: #{tpu_custom_call.1} parent=76 // loop_header
            %s544 = sphi 0, %s548
            %p545 = scmp.ge.s32.totalorder %s544, 1
            %s549 = sphi [#allocation10], [#allocation10]
            %s550 = sphi %s11, %s11
          $region80: #{tpu_custom_call.1} parent=76 // loop_header_branch
            %547 = sbr.rel (%p545) target = $region84
          $region81: #{tpu_custom_call.1} parent=76 // loop_body
            %v551 = vld [vmem:[%s549] sm:$0x3]
            %552 = vst [vmem:[%s550] sm:$0x3] %v551
          $region82: #{tpu_custom_call.1} parent=76 // loop_footer
            %s548 = sadd.s32 1, %s544
          $region83: #{tpu_custom_call.1} parent=76 // loop_footer_branch
            %543 = sbr.rel target = $region79
          $region84: #{tpu_custom_call.1} parent=76 // loop_exit
            _
        $region77: #{tpu_custom_call.1} parent=68 // pred_fallthru
          _
      $region69: #{tpu_custom_call.1} parent=64 // pred_fallthru
        _
      %566 = vnop
    $region65: #{tpu_custom_call.1} parent=1 // pred_fallthru
      _
    // Predicated region
    $region96: #{tpu_custom_call.1} parent=1 // pred_check
      _
    $region97: #{tpu_custom_call.1} parent=1 // pred_check_branch
      %568 = sbr.rel (0) target = $region99
    $region98: #{tpu_custom_call.1} parent=1 // pred_region
      _
    $region99: #{tpu_custom_call.1} parent=1 // pred_fallthru
      _
    %569 = vsyncpa [#allocation4], 1
    %570 = vsyncpa [#allocation6], 1
    %571 = vsyncpa [#allocation9], 1

</llo_original>
